<compile_context>
chip_gen: v7x
topology: tpu7x:2x2x1
jax: 0.10.0
libtpu: 0.0.40
codegen_flags: <defaults>
</compile_context>

<pallas_src>
import functools

import jax
import jax.numpy as jnp
from jax.experimental import pallas as pl
from jax.experimental.pallas import tpu as pltpu


def _round_up(x, m):
    return (x + m - 1) // m * m


def _largest_divisor(n, candidates):
    for c in candidates:
        if c <= n and n % c == 0:
            return c
    return candidates[-1]


def _vmem_capacity_bytes():
    """Trace-time VMEM query; conservative fallback if unavailable."""
    try:
        return int(pltpu.get_tpu_info().vmem_capacity_bytes)
    except Exception:
        return 64 << 20  # v7x per-core VMEM (smallest of the target chips)


# --------------------------------------------------------------------------
# Kernels
# --------------------------------------------------------------------------
def _bilip_kernel_fused(scale_ref, x_ref, wt_ref, kb_ref, o_ref):
    """Single-K-tile fast path.

    scale_ref : SMEM (1,)            k_lipschitz / sigma (traced scalar)
    x_ref     : VMEM (tm, D_pad)     input tile (original dtype) -- used both
                                     as MXU operand (cast in-kernel) and as the
                                     residual.
    wt_ref    : VMEM (D_pad, D_pad)  W^T, resident across the whole grid
    kb_ref    : VMEM (1, D_pad)      k_lipschitz * bias (f32)
    o_ref     : VMEM (tm, D_pad)     output tile (aliased to the x input array)
    """
    x = x_ref[...]
    acc = jnp.dot(x.astype(wt_ref.dtype), wt_ref[...],
                  preferred_element_type=jnp.float32)
    out = scale_ref[0] * acc + kb_ref[...] + x.astype(jnp.float32)
    o_ref[...] = out.astype(o_ref.dtype)


def _bilip_kernel_tiled(scale_ref, x_ref, wt_ref, xres_ref, kb_ref, o_ref,
                        acc_ref):
    """General (i, j, k) tiled path with a resident f32 accumulator."""
    k = pl.program_id(2)

    @pl.when(k == 0)
    def _init():
        acc_ref[...] = jnp.zeros_like(acc_ref)

    acc_ref[...] += jnp.dot(x_ref[...], wt_ref[...],
                            preferred_element_type=jnp.float32)

    @pl.when(k == pl.num_programs(2) - 1)
    def _finalize():
        out = (scale_ref[0] * acc_ref[...]
               + kb_ref[...]
               + xres_ref[...].astype(jnp.float32))
        o_ref[...] = out.astype(o_ref.dtype)


# --------------------------------------------------------------------------
# Wrapper
# --------------------------------------------------------------------------
def bilipschitz_linear(
    x,
    weight,
    bias,
    u,
    *,
    k_lipschitz=1.0,
    eps=1e-12,
    compute_dtype=jnp.bfloat16,
    fuse_k_max=1024,
    tm=None,
    tn=None,
    tk=None,
):
    """y = k_lipschitz * (x @ (W / sigma(W))^T + b) + x  for x of shape (B, D)."""
    B, D = x.shape
    assert weight.shape == (D, D) and bias.shape == (D,) and u.shape == (D,)
    orig_dtype = x.dtype

    # --- spectral norm: one power iteration (PyTorch default), plain JAX ----
    def _l2n(v):
        return v / jnp.maximum(jnp.linalg.norm(v), eps)

    v = _l2n(weight.T @ u)
    Wv = weight @ v
    u_new = _l2n(Wv)
    sigma = u_new @ Wv
    # TODO(synk): PyTorch's spectral_norm writes the updated `u` buffer back in
    # training mode; this functional forward does not return u_new.

    # Fold 1/sigma and k_lipschitz into a scalar / bias vector instead of
    # normalizing the full DxD weight (no D^2 divide, no extra D^2 HBM trip).
    scale = jnp.reshape(k_lipschitz / sigma, (1,)).astype(jnp.float32)
    kbias = (float(k_lipschitz) * bias).astype(jnp.float32)

    # --- padding (decoupled from tile size) and tile selection --------------
    D_pad = _round_up(D, 128)
    B_pad = _round_up(B, 16) if B <= 128 else _round_up(B, 128)

    vmem_cap = _vmem_capacity_bytes()
    big_vmem = vmem_cap >= (100 << 20)          # v5e / v6e: 128 MiB per core
    tm_cap = 2048 if big_vmem else 1024         # v7x: 64 MiB per core
    budget = (48 << 20) if big_vmem else (24 << 20)
    limit_cap = (64 << 20) if big_vmem else (40 << 20)

    if tm is None:
        if B_pad <= 128:
            tm = B_pad
        else:
            tm = next(c for c in (2048, 1024, 512, 256, 128)
                      if c <= tm_cap and c <= B_pad and B_pad % c == 0)

    xb = jnp.dtype(orig_dtype).itemsize
    cb = jnp.dtype(compute_dtype).itemsize

    x_pad = jnp.pad(x, ((0, B_pad - B), (0, D_pad - D)))
    # TODO(synk): for frozen / inference weights, precompute this bf16 W^T once
    # outside the per-step call to drop the per-call D^2 transpose+cast trip.
    wt = jnp.pad(weight, ((0, D_pad - D), (0, D_pad - D))).T.astype(compute_dtype)
    kb2d = jnp.pad(kbias, (0, D_pad - D)).reshape(1, D_pad)

    cost = pl.CostEstimate(
        flops=2 * B_pad * D_pad * D_pad,
        transcendentals=0,
        bytes_accessed=B_pad * D_pad * xb * 2 + D_pad * D_pad * cb,
    )

    fused = (D_pad <= fuse_k_max) and tn is None and tk is None

    if fused:
        # ----- fast path: W^T resident, single x stream, no accumulator -----
        def footprint(t):
            return 2 * (t * D_pad * xb + D_pad * D_pad * cb
                        + D_pad * 4 + t * D_pad * xb)

        while tm > 128 and footprint(tm) > budget:
            tm //= 2
        vmem_limit = int(min(max(footprint(tm) + (12 << 20), 32 << 20),
                             limit_cap))

        out = pl.pallas_call(
            _bilip_kernel_fused,
            out_shape=jax.ShapeDtypeStruct((B_pad, D_pad), orig_dtype),
            grid_spec=pltpu.PrefetchScalarGridSpec(
                num_scalar_prefetch=0,
                grid=(B_pad // tm,),
                in_specs=[
                    pl.BlockSpec(memory_space=pltpu.MemorySpace.SMEM),
                    pl.BlockSpec((tm, D_pad), lambda i: (i, 0)),
                    pl.BlockSpec((D_pad, D_pad), lambda i: (0, 0)),
                    pl.BlockSpec((1, D_pad), lambda i: (0, 0)),
                ],
                out_specs=pl.BlockSpec((tm, D_pad), lambda i: (i, 0)),
            ),
            compiler_params=pltpu.CompilerParams(
                dimension_semantics=("parallel",),
                vmem_limit_bytes=vmem_limit,
            ),
            cost_estimate=cost,
            input_output_aliases={1: 0},   # padded x buffer reused for output
        )(scale, x_pad, wt, kb2d)
        return out[:B, :D]

    # ----- general tiled path (large D) --------------------------------------
    if tn is None:
        tn = _largest_divisor(D_pad, (1024, 512, 256, 128))
    if tk is None:
        tk = _largest_divisor(D_pad, (512, 256, 128))

    def footprint(t):
        return (2 * (t * tk * cb + tk * tn * cb + t * tn * xb + tn * 4
                     + t * tn * xb)
                + t * tn * 4)

    while tm > 128 and footprint(tm) > budget:
        tm //= 2
    vmem_limit = int(min(max(footprint(tm) + (12 << 20), 32 << 20), limit_cap))

    x_mm = x_pad.astype(compute_dtype)
    # Only alias the residual buffer to the output when the matmul stream is a
    # genuinely separate (cast) buffer, otherwise later k/j steps could re-read
    # already-overwritten columns.
    alias = ({3: 0} if jnp.dtype(compute_dtype) != jnp.dtype(orig_dtype)
             else {})

    out = pl.pallas_call(
        _bilip_kernel_tiled,
        out_shape=jax.ShapeDtypeStruct((B_pad, D_pad), orig_dtype),
        grid_spec=pltpu.PrefetchScalarGridSpec(
            num_scalar_prefetch=0,
            grid=(B_pad // tm, D_pad // tn, D_pad // tk),
            in_specs=[
                pl.BlockSpec(memory_space=pltpu.MemorySpace.SMEM),
                pl.BlockSpec((tm, tk), lambda i, j, k: (i, k)),
                pl.BlockSpec((tk, tn), lambda i, j, k: (k, j)),
                pl.BlockSpec((tm, tn), lambda i, j, k: (i, j)),
                pl.BlockSpec((1, tn), lambda i, j, k: (0, j)),
            ],
            out_specs=pl.BlockSpec((tm, tn), lambda i, j, k: (i, j)),
            scratch_shapes=[pltpu.VMEM((tm, tn), jnp.float32)],
        ),
        compiler_params=pltpu.CompilerParams(
            dimension_semantics=("parallel", "parallel", "arbitrary"),
            vmem_limit_bytes=vmem_limit,
        ),
        cost_estimate=cost,
        input_output_aliases=alias,
    )(scale, x_mm, wt, x_pad, kb2d)
    return out[:B, :D]


# --------------------------------------------------------------------------
# Pure-JAX reference
# --------------------------------------------------------------------------
def _reference(x, weight, bias, u, *, k_lipschitz=1.0, eps=1e-12):
    def _l2n(v):
        return v / jnp.maximum(jnp.linalg.norm(v), eps)

    v = _l2n(weight.T @ u)
    Wv = weight @ v
    u_new = _l2n(Wv)
    sigma = u_new @ Wv
    w_sn = weight / sigma
    return k_lipschitz * (x @ w_sn.T + bias) + x


if __name__ == "__main__":
    # Small shapes consistent with the module: input_dim == output_dim.
    B, D = 8, 32
    k_lipschitz = 1.0

    key = jax.random.PRNGKey(0)
    kx, kw, kb, ku = jax.random.split(key, 4)

    bound = 1.0 / (D ** 0.5)
    x = jax.random.normal(kx, (B, D), dtype=jnp.float32)
    weight = jax.random.uniform(kw, (D, D), minval=-bound, maxval=bound,
                                dtype=jnp.float32)
    bias = jax.random.uniform(kb, (D,), minval=-bound, maxval=bound,
                              dtype=jnp.float32)
    # spectral_norm's `u` buffer: random normal, L2-normalized.
    u = jax.random.normal(ku, (D,), dtype=jnp.float32)
    u = u / jnp.maximum(jnp.linalg.norm(u), 1e-12)

    ref = _reference(x, weight, bias, u, k_lipschitz=k_lipschitz)

    # Fused (single-K-tile) path, f32 MXU operands: tight check.
    fwd_f32 = jax.jit(functools.partial(
        bilipschitz_linear, k_lipschitz=k_lipschitz, compute_dtype=jnp.float32))
    out_f32 = jax.block_until_ready(fwd_f32(x, weight, bias, u))
    assert out_f32.shape == (B, D)
    assert jnp.allclose(out_f32, ref, atol=2e-4, rtol=2e-4), "fused f32 mismatch"

    # General tiled path (forced via fuse_k_max=0), f32 MXU: tight check.
    fwd_tiled = jax.jit(functools.partial(
        bilipschitz_linear, k_lipschitz=k_lipschitz, compute_dtype=jnp.float32,
        fuse_k_max=0))
    out_tiled = jax.block_until_ready(fwd_tiled(x, weight, bias, u))
    assert out_tiled.shape == (B, D)
    assert jnp.allclose(out_tiled, ref, atol=2e-4, rtol=2e-4), "tiled f32 mismatch"

    # Default bf16 MXU path (the fast path on v6e/v7x): loose check.
    fwd_bf16 = jax.jit(functools.partial(
        bilipschitz_linear, k_lipschitz=k_lipschitz, compute_dtype=jnp.bfloat16))
    out_bf16 = jax.block_until_ready(fwd_bf16(x, weight, bias, u))
    assert out_bf16.shape == (B, D)
    assert jnp.max(jnp.abs(out_bf16 - ref)) < 1e-1, "bf16 mismatch vs ref"

    print("KERNEL_OK")
</pallas_src>

<mosaic_0001>
module attributes {stable_mosaic.version = 11 : i64} {
  func.func @_bilip_kernel_fused(%arg0: i32, %arg1: memref<1xf32, #tpu.memory_space<smem>>, %arg2: memref<16x128xf32, #tpu.memory_space<vmem>>, %arg3: memref<128x128xf32, #tpu.memory_space<vmem>>, %arg4: memref<1x128xf32, #tpu.memory_space<vmem>>, %arg5: memref<16x128xf32, #tpu.memory_space<vmem>>) attributes {dimension_semantics = [#tpu.dimension_semantics<parallel>], iteration_bounds = array<i64: 1>, scalar_prefetch = 0 : i64, scratch_operands = 0 : i64, tpu.core_type = #tpu.core_type<tc>, window_params = [{transform_indices = @transform_0, window_bounds = array<i64: 1>}, {transform_indices = @transform_1, window_bounds = array<i64: 16, 128>}, {pipeline_mode = #tpu.pipeline_mode<synchronous>, transform_indices = @transform_2, window_bounds = array<i64: 128, 128>}, {pipeline_mode = #tpu.pipeline_mode<synchronous>, transform_indices = @transform_3, window_bounds = array<i64: 1, 128>}, {transform_indices = @transform_4, window_bounds = array<i64: 16, 128>}]} {
    %c0 = arith.constant 0 : index
    %c0_0 = arith.constant 0 : index
    %0 = vector.load %arg2[%c0, %c0_0] : memref<16x128xf32, #tpu.memory_space<vmem>>, vector<16x128xf32>
    %c0_1 = arith.constant 0 : index
    %c0_2 = arith.constant 0 : index
    %1 = vector.load %arg3[%c0_1, %c0_2] : memref<128x128xf32, #tpu.memory_space<vmem>>, vector<128x128xf32>
    %cst = arith.constant dense<0.000000e+00> : vector<16x128xf32>
    %2 = tpu.matmul %0, %1, %cst {dimension_numbers = #tpu.dot_dimension_numbers<[1], [0], [0], [1], [0, 0, 1, 1], [], []>} : vector<16x128xf32>, vector<128x128xf32>, vector<16x128xf32> -> vector<16x128xf32>
    %c0_3 = arith.constant 0 : index
    %3 = memref.load %arg1[%c0_3] : memref<1xf32, #tpu.memory_space<smem>>
    %4 = vector.broadcast %3 : f32 to vector<16x128xf32>
    %5 = arith.mulf %4, %2 : vector<16x128xf32>
    %c0_4 = arith.constant 0 : index
    %c0_5 = arith.constant 0 : index
    %6 = vector.load %arg4[%c0_4, %c0_5] : memref<1x128xf32, #tpu.memory_space<vmem>>, vector<1x128xf32>
    %7 = vector.broadcast %6 : vector<1x128xf32> to vector<16x128xf32>
    %8 = arith.addf %5, %7 : vector<16x128xf32>
    %9 = arith.addf %8, %0 : vector<16x128xf32>
    %c0_6 = arith.constant 0 : index
    %c0_7 = arith.constant 0 : index
    %10 = vector.load %arg5[%c0_6, %c0_7] : memref<16x128xf32, #tpu.memory_space<vmem>>, vector<16x128xf32>
    tpu.vector_store %arg5[%c0_6, %c0_7], %9 {strides = array<i32>} : memref<16x128xf32, #tpu.memory_space<vmem>>, vector<16x128xf32>,
    return
  }
  func.func @transform_0(%arg0: i32) -> i32 {
    %c0_i32 = arith.constant 0 : i32
    %c0_i32_0 = arith.constant 0 : i32
    return %c0_i32 : i32
  }
  func.func @transform_1(%arg0: i32) -> (i32, i32) {
    %c0_i32 = arith.constant 0 : i32
    %c0_i32_0 = arith.constant 0 : i32
    return %arg0, %c0_i32 : i32, i32
  }
  func.func @transform_2(%arg0: i32) -> (i32, i32) {
    %c0_i32 = arith.constant 0 : i32
    %c0_i32_0 = arith.constant 0 : i32
    %c0_i32_1 = arith.constant 0 : i32
    return %c0_i32, %c0_i32_0 : i32, i32
  }
  func.func @transform_3(%arg0: i32) -> (i32, i32) {
    %c0_i32 = arith.constant 0 : i32
    %c0_i32_0 = arith.constant 0 : i32
    %c0_i32_1 = arith.constant 0 : i32
    return %c0_i32, %c0_i32_0 : i32, i32
  }
  func.func @transform_4(%arg0: i32) -> (i32, i32) {
    %c0_i32 = arith.constant 0 : i32
    %c0_i32_0 = arith.constant 0 : i32
    return %arg0, %c0_i32 : i32, i32
  }
}

</mosaic_0001>

<llo_original>
// kernel: bilipschitz_linear.1
$region0: #{bilipschitz_linear.1}
  #allocation0 [shape = 'u32[]', space=smem, size = 0x4, offset = 0x4, fixed_abs, tag = 'smem constant byte address 0x4 - core index']
  #allocation1 [shape = 'u32[144,128]{1,0:T(1,128)}', space=vmem, size = 0x12000, scoped, tag = 'internal scratch']
  #allocation2 [shape = 'f32[1]{0:T(128)S(6)}', space=smem, size = 0x200, scoped, tag = 'scoped memory for bilipschitz_linear.1']
  %s0 = inlined_call_operand.<no memory space> [shape: f32[1], index: 0, kind: input, shape index: {}]
  %s1 = inlined_call_operand.vmem [shape: f32[16,128], index: 1, kind: input, shape index: {}, may-alias: {1,4}]
  %s2 = inlined_call_operand.vmem [shape: f32[128,128], index: 2, kind: input, shape index: {}]
  %s3 = inlined_call_operand.vmem [shape: f32[1,128], index: 3, kind: input, shape index: {}]
  %s4 = inlined_call_operand.vmem [shape: f32[16,128], index: 4, kind: output, shape index: {}, may-alias: {1,4}]
  %s5 = sld [smem:[#allocation0]]
  $region26: #{bilipschitz_linear.1} parent=0
    _
  %s7 = ssub.s32 1, %s5
  %s8 = scalar_select 0, %s7, %s5
  %9 = sst [smem:[#allocation2]] %s0
  // Predicated region
  $region2: #{bilipschitz_linear.1} parent=0 // pred_check
    _
  $region3: #{bilipschitz_linear.1} parent=0 // pred_check_branch
    %11 = sbr.rel (0) target = $region5
  $region4: #{bilipschitz_linear.1} parent=0 // pred_region
    _
  $region5: #{bilipschitz_linear.1} parent=0 // pred_fallthru
    _
  // Predicated region
  $region6: #{bilipschitz_linear.1} parent=0 // pred_check
    _
  $region7: #{bilipschitz_linear.1} parent=0 // pred_check_branch
    %13 = sbr.rel (0) target = $region9
  $region8: #{bilipschitz_linear.1} parent=0 // pred_region
    _
  $region9: #{bilipschitz_linear.1} parent=0 // pred_fallthru
    _
  // Predicated region
  $region10: #{bilipschitz_linear.1} parent=0 // pred_check
    _
  $region11: #{bilipschitz_linear.1} parent=0 // pred_check_branch
    %15 = sbr.rel (0) target = $region13
  $region12: #{bilipschitz_linear.1} parent=0 // pred_region
    _
  $region13: #{bilipschitz_linear.1} parent=0 // pred_fallthru
    _
  // Predicated region
  $region14: #{bilipschitz_linear.1} parent=0 // pred_check
    _
  $region15: #{bilipschitz_linear.1} parent=0 // pred_check_branch
    %17 = sbr.rel (0) target = $region17
  $region16: #{bilipschitz_linear.1} parent=0 // pred_region
    _
  $region17: #{bilipschitz_linear.1} parent=0 // pred_fallthru
    _
  %v18 = vld [vmem:[%s1] sm:$0xff]
  %v19 = vld [vmem:[%s1 + $0x8] sm:$0xff]
  %v20 = vld [vmem:[%s2] sm:$0xff]
  %v21 = vld [vmem:[%s2 + $0x8] sm:$0xff]
  %v22 = vld [vmem:[%s2 + $0x10] sm:$0xff]
  %v23 = vld [vmem:[%s2 + $0x18] sm:$0xff]
  %v24 = vld [vmem:[%s2 + $0x20] sm:$0xff]
  %v25 = vld [vmem:[%s2 + $0x28] sm:$0xff]
  %v26 = vld [vmem:[%s2 + $0x30] sm:$0xff]
  %v27 = vld [vmem:[%s2 + $0x38] sm:$0xff]
  %v28 = vld [vmem:[%s2 + $0x40] sm:$0xff]
  %v29 = vld [vmem:[%s2 + $0x48] sm:$0xff]
  %v30 = vld [vmem:[%s2 + $0x50] sm:$0xff]
  %v31 = vld [vmem:[%s2 + $0x58] sm:$0xff]
  %v32 = vld [vmem:[%s2 + $0x60] sm:$0xff]
  %v33 = vld [vmem:[%s2 + $0x68] sm:$0xff]
  %v34 = vld [vmem:[%s2 + $0x70] sm:$0xff]
  %v35 = vld [vmem:[%s2 + $0x78] sm:$0xff]
  %36 = vmatprep.subr.mxu0 0.0
  %37 = vmatpush1.msra.mxu0 %v20
  %38 = vmatprep.subr.mxu0 0.0
  %39 = vmatpush1.msra.mxu0 %v21
  %40 = vmatprep.subr.mxu0 0.0
  %41 = vmatpush1.msra.mxu0 %v22
  %42 = vmatprep.subr.mxu0 0.0
  %43 = vmatpush1.msra.mxu0 %v23
  %44 = vmatprep.subr.mxu0 0.0
  %45 = vmatpush1.msra.mxu0 %v24
  %46 = vmatprep.subr.mxu0 0.0
  %47 = vmatpush1.msra.mxu0 %v25
  %48 = vmatprep.subr.mxu0 0.0
  %49 = vmatpush1.msra.mxu0 %v26
  %50 = vmatprep.subr.mxu0 0.0
  %51 = vmatpush1.msra.mxu0 %v27
  %52 = vmatprep.subr.mxu0 0.0
  %53 = vmatpush1.msra.mxu0 %v28
  %54 = vmatprep.subr.mxu0 0.0
  %55 = vmatpush1.msra.mxu0 %v29
  %56 = vmatprep.subr.mxu0 0.0
  %57 = vmatpush1.msra.mxu0 %v30
  %58 = vmatprep.subr.mxu0 0.0
  %59 = vmatpush1.msra.mxu0 %v31
  %60 = vmatprep.subr.mxu0 0.0
  %61 = vmatpush1.msra.mxu0 %v32
  %62 = vmatprep.subr.mxu0 0.0
  %63 = vmatpush1.msra.mxu0 %v33
  %64 = vmatprep.subr.mxu0 0.0
  %65 = vmatpush1.msra.mxu0 %v34
  %66 = vmatprep.subr.mxu0 0.0
  %67 = vmatpush1.msra.mxu0 %v35
  %68 = vmatprep.subr.mxu0 0.0
  %69 = vmatpush1.msra.mxu0 0.0
  %70 = vmatprep.subr.mxu0 0.0
  %71 = vmatpush1.msra.mxu0 0.0
  %72 = vmatprep.subr.mxu0 0.0
  %73 = vmatpush1.msra.mxu0 0.0
  %74 = vmatprep.subr.mxu0 0.0
  %75 = vmatpush1.msra.mxu0 0.0
  %76 = vmatprep.subr.mxu0 0.0
  %77 = vmatpush1.msra.mxu0 0.0
  %78 = vmatprep.subr.mxu0 0.0
  %79 = vmatpush1.msra.mxu0 0.0
  %80 = vmatprep.subr.mxu0 0.0
  %81 = vmatpush1.msra.mxu0 0.0
  %82 = vmatprep.subr.mxu0 0.0
  %83 = vmatpush1.msra.mxu0 0.0
  %84 = vmatprep.subr.mxu0 0.0
  %85 = vmatpush1.msra.mxu0 0.0
  %86 = vmatprep.subr.mxu0 0.0
  %87 = vmatpush1.msra.mxu0 0.0
  %88 = vmatprep.subr.mxu0 0.0
  %89 = vmatpush1.msra.mxu0 0.0
  %90 = vmatprep.subr.mxu0 0.0
  %91 = vmatpush1.msra.mxu0 0.0
  %92 = vmatprep.subr.mxu0 0.0
  %93 = vmatpush1.msra.mxu0 0.0
  %94 = vmatprep.subr.mxu0 0.0
  %95 = vmatpush1.msra.mxu0 0.0
  %96 = vmatprep.subr.mxu0 0.0
  %97 = vmatpush1.msra.mxu0 0.0
  %98 = vmatprep.subr.mxu0 0.0
  %99 = vmatpush1.msra.mxu0 0.0
  %100 = vmatprep.mubr.f32.mxu0 0.0
  %101 = vmatmul.mubr.f32.gmra.mrb[0].mxu0 %v18
  %v102 = vpop.f32.mrb[0].mxu0
  %v103 = vadd.f32 0.0, %v102
  %v104 = vpop.f32.mrb[0].mxu0
  %105 = vmatprep.mubr.f32.mxu0 0.0
  %106 = vmatmul.mubr.f32.gmra.mrb[0].mxu0 %v19
  %v107 = vpop.f32.mrb[0].mxu0
  %v108 = vadd.f32 0.0, %v107
  %v109 = vpop.f32.mrb[0].mxu0
  %110 = vdwg.mxu0
  %s111 = sld [smem:[#allocation2]]
  %v112 = vstv %s111
  %v113 = vmul.f32 %v112, %v103
  %v114 = vmul.f32 %v112, %v108
  %v115 = vld [vmem:[%s3] sm:$0x1]
  %v117 = vlaneseq
  %v118 = vshrl.u32 %v117, 7
  %v119 = vsub.s32 0, %v118
  %v120 = vrot.slane %v115, %v119
  %v122 = vadd.f32 %v113, %v120
  %v123 = vadd.f32 %v114, %v120
  %v124 = vadd.f32 %v122, %v18
  %v125 = vadd.f32 %v123, %v19
  %126 = vst [vmem:[%s4] sm:$0xff] %v124
  %127 = vst [vmem:[%s4 + $0x8] sm:$0xff] %v125
  // Predicated region
  $region18: #{bilipschitz_linear.1} parent=0 // pred_check
    _
  $region19: #{bilipschitz_linear.1} parent=0 // pred_check_branch
    %129 = sbr.rel (0) target = $region21
  $region20: #{bilipschitz_linear.1} parent=0 // pred_region
    _
  $region21: #{bilipschitz_linear.1} parent=0 // pred_fallthru
    _
  // Predicated region
  $region22: #{bilipschitz_linear.1} parent=0 // pred_check
    _
  $region23: #{bilipschitz_linear.1} parent=0 // pred_check_branch
    %131 = sbr.rel (0) target = $region25
  $region24: #{bilipschitz_linear.1} parent=0 // pred_region
    _
  $region25: #{bilipschitz_linear.1} parent=0 // pred_fallthru
    _

</llo_original>
